<compile_context>
chip_gen: v5e
topology: v5e:2x2
jax: 0.10.0
libtpu: 0.0.40
codegen_flags: <defaults>
</compile_context>

<pallas_src>
import functools
import math

import jax
import jax.numpy as jnp
import numpy as np
from jax.experimental import pallas as pl
from jax.experimental.pallas import tpu as pltpu


# -----------------------------------------------------------------------------
# Kernel: fused 4-subnet MLP forward for one batch tile.
# -----------------------------------------------------------------------------
def _fused_mlp_kernel(x_ref, w1_ref, b1_ref, w2_ref, b2_ref, out_ref):
    # x_ref  : [tile_B, D]      (input dtype, e.g. f32 — cast in-vreg below)
    # w1_ref : [D, 4H]          concatenated body weights (compute dtype, bf16)
    # b1_ref : [1, 4H]          concatenated body biases  (f32)
    # w2_ref : [4H, N_pad]      block-diagonal packed head weights (bf16)
    # b2_ref : [1, N_pad]       packed head biases (f32)
    # out_ref: [tile_B, N_pad]  packed logits/values (lane-dense, bf16 or f32)
    x = x_ref[...].astype(w1_ref.dtype)                                # in-vreg cast
    h = jnp.dot(x, w1_ref[...], preferred_element_type=jnp.float32)    # MXU, f32 acc
    h = jnp.tanh(h + b1_ref[...])                                      # f32 VPU + EUP
    o = jnp.dot(h.astype(w2_ref.dtype), w2_ref[...],
                preferred_element_type=jnp.float32)                    # MXU, f32 acc
    out_ref[...] = (o + b2_ref[...]).astype(out_ref.dtype)


# -----------------------------------------------------------------------------
# Parameter construction / packing (plain JAX glue).
# -----------------------------------------------------------------------------
_SUBNETS = ("actor", "critic", "termination", "actor_w")


def _round_up(v, m):
    return (v + m - 1) // m * m


def init_params(key, d_in, hidden, n_w, n_a):
    """Deterministic synthetic init mirroring torch.nn.Linear defaults."""
    out_dims = {"actor": n_w * n_a, "critic": n_w, "termination": n_w, "actor_w": n_w}
    params = {}
    for name in _SUBNETS:
        key, k1, k2, k3, k4 = jax.random.split(key, 5)
        lim1 = 1.0 / math.sqrt(d_in)
        lim2 = 1.0 / math.sqrt(hidden)
        w1 = jax.random.uniform(k1, (d_in, hidden), jnp.float32, -lim1, lim1)
        b1 = jax.random.uniform(k2, (hidden,), jnp.float32, -lim1, lim1)
        w2 = jax.random.uniform(k3, (hidden, out_dims[name]), jnp.float32, -lim2, lim2)
        b2 = jax.random.uniform(k4, (out_dims[name],), jnp.float32, -lim2, lim2)
        params[name] = (w1, b1, w2, b2)
    return params


def pack_params(params, n_w, n_a, compute_dtype=jnp.bfloat16, lane_pad=128):
    """Pack 4 sub-network params into fused body + block-diagonal head."""
    out_dims = (n_w * n_a, n_w, n_w, n_w)
    hidden = params["actor"][0].shape[1]

    w1_all = jnp.concatenate([params[n][0] for n in _SUBNETS], axis=1)        # [D, 4H]
    b1_all = jnp.concatenate([params[n][1] for n in _SUBNETS], axis=0)[None]  # [1, 4H]

    n_total = sum(out_dims)
    n_pad = _round_up(n_total, lane_pad)
    h4 = 4 * hidden

    w2_blk = jnp.zeros((h4, n_pad), jnp.float32)
    b2_pack = jnp.zeros((n_pad,), jnp.float32)
    col = 0
    for k, name in enumerate(_SUBNETS):
        w2, b2 = params[name][2], params[name][3]
        o = out_dims[k]
        w2_blk = w2_blk.at[k * hidden:(k + 1) * hidden, col:col + o].set(w2)
        b2_pack = b2_pack.at[col:col + o].set(b2)
        col += o

    return (w1_all.astype(compute_dtype),
            b1_all.astype(jnp.float32),
            w2_blk.astype(compute_dtype),
            b2_pack[None, :].astype(jnp.float32))


def _choose_tile_b(batch, tile_b_max):
    """Balanced batch tiles; >=2 grid steps when B >= 16 (v7x megacore)."""
    n_tiles = max(1, -(-batch // tile_b_max))
    if batch >= 16:
        n_tiles = max(n_tiles, 2)
    return max(8, _round_up(-(-batch // n_tiles), 8))


# -----------------------------------------------------------------------------
# Forward wrapper: one pallas_call for all four sub-networks.
# -----------------------------------------------------------------------------
def option_critic_unshared_forward(x, packed, n_w, n_a, tile_b_max=2048,
                                   out_dtype=jnp.bfloat16):
    w1_all, b1_all, w2_blk, b2_pack = packed
    B, D = x.shape
    h4 = w1_all.shape[1]
    n_pad = w2_blk.shape[1]

    tile_b = _choose_tile_b(B, tile_b_max)
    grid = (pl.cdiv(B, tile_b),)

    # Resident weights: single-buffer them only when double-buffering would
    # waste real VMEM (their block index never changes across the grid).
    w_bytes = (w1_all.size * w1_all.dtype.itemsize
               + w2_blk.size * w2_blk.dtype.itemsize)
    w_spec_kwargs = {}
    if w_bytes > (4 << 20):
        w_spec_kwargs = dict(pipeline_mode=pl.Buffered(1))
    w_bufs = 1 if w_spec_kwargs else 2

    # VMEM budget with headroom (double-buffered x / out tiles + resident
    # weights + f32 intermediate + its bf16 recast).
    out_isize = jnp.dtype(out_dtype).itemsize
    est = (2 * tile_b * D * x.dtype.itemsize
           + 2 * tile_b * n_pad * out_isize
           + w_bufs * w_bytes
           + w_bufs * 4 * (h4 + n_pad)
           + tile_b * h4 * (4 + w1_all.dtype.itemsize))
    vmem_limit = min(100 << 20, max(16 << 20, int(1.5 * est) + (4 << 20)))

    out = pl.pallas_call(
        _fused_mlp_kernel,
        out_shape=jax.ShapeDtypeStruct((B, n_pad), out_dtype),
        grid_spec=pltpu.PrefetchScalarGridSpec(
            num_scalar_prefetch=0,
            grid=grid,
            in_specs=[
                pl.BlockSpec((tile_b, D), lambda i: (i, 0)),   # x: streamed per tile
                pl.BlockSpec((D, h4), lambda i: (0, 0), **w_spec_kwargs),
                pl.BlockSpec((1, h4), lambda i: (0, 0), **w_spec_kwargs),
                pl.BlockSpec((h4, n_pad), lambda i: (0, 0), **w_spec_kwargs),
                pl.BlockSpec((1, n_pad), lambda i: (0, 0), **w_spec_kwargs),
            ],
            out_specs=pl.BlockSpec((tile_b, n_pad), lambda i: (i, 0)),
        ),
        compiler_params=pltpu.CompilerParams(
            dimension_semantics=("parallel",),
            vmem_limit_bytes=vmem_limit,
        ),
    )(x, w1_all, b1_all, w2_blk, b2_pack)

    nwa = n_w * n_a
    pi = out[:, :nwa].reshape(B, n_w, n_a)
    q = out[:, nwa:nwa + n_w]
    beta = out[:, nwa + n_w:nwa + 2 * n_w]
    pi_w = out[:, nwa + 2 * n_w:nwa + 3 * n_w]
    # Same return order as the PyTorch module: (pi, q, beta, pi_w).
    return pi, q, beta, pi_w


# -----------------------------------------------------------------------------
# Pure-JAX reference (same dtype flow) for a correctness check.
# -----------------------------------------------------------------------------
def _ref_forward(x, params, n_w, n_a, compute_dtype, out_dtype):
    def subnet(w1, b1, w2, b2):
        h = jnp.dot(x.astype(compute_dtype), w1.astype(compute_dtype),
                    preferred_element_type=jnp.float32)
        h = jnp.tanh(h + b1.astype(jnp.float32)[None, :])
        o = jnp.dot(h.astype(compute_dtype), w2.astype(compute_dtype),
                    preferred_element_type=jnp.float32)
        return (o + b2.astype(jnp.float32)[None, :]).astype(out_dtype)

    B = x.shape[0]
    pi = subnet(*params["actor"]).reshape(B, n_w, n_a)
    q = subnet(*params["critic"])
    beta = subnet(*params["termination"])
    pi_w = subnet(*params["actor_w"])
    return pi, q, beta, pi_w


# -----------------------------------------------------------------------------
# Demo
# -----------------------------------------------------------------------------
if __name__ == "__main__":
    B, D, H, N_W, N_A = 8, 64, 64, 4, 6      # small RL-style shapes

    key = jax.random.PRNGKey(0)
    kx, kp = jax.random.split(key)
    x = jax.random.normal(kx, (B, D), jnp.float32)
    params = init_params(kp, D, H, N_W, N_A)

    compute_dtype = jnp.bfloat16
    out_dtype = jnp.bfloat16
    packed = pack_params(params, N_W, N_A, compute_dtype=compute_dtype)

    fwd = jax.jit(functools.partial(option_critic_unshared_forward,
                                    n_w=N_W, n_a=N_A, tile_b_max=2048,
                                    out_dtype=out_dtype))

    pi, q, beta, pi_w = jax.block_until_ready(fwd(x, packed))

    # Sanity check against the pure-JAX reference (same dtype flow).
    pi_r, q_r, beta_r, pi_w_r = _ref_forward(x, params, N_W, N_A,
                                             compute_dtype, out_dtype)

    def _cmp(a, b):
        np.testing.assert_allclose(np.asarray(a.astype(jnp.float32)),
                                   np.asarray(b.astype(jnp.float32)),
                                   atol=1e-2, rtol=1e-2)

    _cmp(pi, pi_r)
    _cmp(q, q_r)
    _cmp(beta, beta_r)
    _cmp(pi_w, pi_w_r)

    assert pi.shape == (B, N_W, N_A) and q.shape == (B, N_W)
    assert beta.shape == (B, N_W) and pi_w.shape == (B, N_W)

    print("KERNEL_OK")
</pallas_src>

<mosaic_0001>
module attributes {stable_mosaic.version = 11 : i64} {
  func.func @_fused_mlp_kernel(%arg0: i32, %arg1: memref<8x64xf32, #tpu.memory_space<vmem>>, %arg2: memref<64x256xbf16, #tpu.memory_space<vmem>>, %arg3: memref<1x256xf32, #tpu.memory_space<vmem>>, %arg4: memref<256x128xbf16, #tpu.memory_space<vmem>>, %arg5: memref<1x128xf32, #tpu.memory_space<vmem>>, %arg6: memref<8x128xbf16, #tpu.memory_space<vmem>>) attributes {dimension_semantics = [#tpu.dimension_semantics<parallel>], iteration_bounds = array<i64: 1>, scalar_prefetch = 0 : i64, scratch_operands = 0 : i64, tpu.core_type = #tpu.core_type<tc>, window_params = [{transform_indices = @transform_0, window_bounds = array<i64: 8, 64>}, {pipeline_mode = #tpu.pipeline_mode<synchronous>, transform_indices = @transform_1, window_bounds = array<i64: 64, 256>}, {pipeline_mode = #tpu.pipeline_mode<synchronous>, transform_indices = @transform_2, window_bounds = array<i64: 1, 256>}, {pipeline_mode = #tpu.pipeline_mode<synchronous>, transform_indices = @transform_3, window_bounds = array<i64: 256, 128>}, {pipeline_mode = #tpu.pipeline_mode<synchronous>, transform_indices = @transform_4, window_bounds = array<i64: 1, 128>}, {transform_indices = @transform_5, window_bounds = array<i64: 8, 128>}]} {
    %c0 = arith.constant 0 : index
    %c0_0 = arith.constant 0 : index
    %0 = vector.load %arg1[%c0, %c0_0] : memref<8x64xf32, #tpu.memory_space<vmem>>, vector<8x64xf32>
    %1 = arith.truncf %0 : vector<8x64xf32> to vector<8x64xbf16>
    %c0_1 = arith.constant 0 : index
    %c0_2 = arith.constant 0 : index
    %2 = vector.load %arg2[%c0_1, %c0_2] : memref<64x256xbf16, #tpu.memory_space<vmem>>, vector<64x256xbf16>
    %cst = arith.constant dense<0.000000e+00> : vector<8x256xf32>
    %3 = tpu.matmul %1, %2, %cst {dimension_numbers = #tpu.dot_dimension_numbers<[1], [0], [0], [1], [0, 0, 1, 1], [], []>} : vector<8x64xbf16>, vector<64x256xbf16>, vector<8x256xf32> -> vector<8x256xf32>
    %c0_3 = arith.constant 0 : index
    %c0_4 = arith.constant 0 : index
    %4 = vector.load %arg3[%c0_3, %c0_4] : memref<1x256xf32, #tpu.memory_space<vmem>>, vector<1x256xf32>
    %5 = vector.broadcast %4 : vector<1x256xf32> to vector<8x256xf32>
    %6 = arith.addf %3, %5 : vector<8x256xf32>
    %7 = math.tanh %6 : vector<8x256xf32>
    %8 = arith.truncf %7 : vector<8x256xf32> to vector<8x256xbf16>
    %c0_5 = arith.constant 0 : index
    %c0_6 = arith.constant 0 : index
    %9 = vector.load %arg4[%c0_5, %c0_6] : memref<256x128xbf16, #tpu.memory_space<vmem>>, vector<256x128xbf16>
    %cst_7 = arith.constant dense<0.000000e+00> : vector<8x128xf32>
    %10 = tpu.matmul %8, %9, %cst_7 {dimension_numbers = #tpu.dot_dimension_numbers<[1], [0], [0], [1], [0, 0, 1, 1], [], []>} : vector<8x256xbf16>, vector<256x128xbf16>, vector<8x128xf32> -> vector<8x128xf32>
    %c0_8 = arith.constant 0 : index
    %c0_9 = arith.constant 0 : index
    %11 = vector.load %arg5[%c0_8, %c0_9] : memref<1x128xf32, #tpu.memory_space<vmem>>, vector<1x128xf32>
    %12 = vector.broadcast %11 : vector<1x128xf32> to vector<8x128xf32>
    %13 = arith.addf %10, %12 : vector<8x128xf32>
    %14 = arith.truncf %13 : vector<8x128xf32> to vector<8x128xbf16>
    %c0_10 = arith.constant 0 : index
    %c0_11 = arith.constant 0 : index
    %15 = vector.load %arg6[%c0_10, %c0_11] : memref<8x128xbf16, #tpu.memory_space<vmem>>, vector<8x128xbf16>
    tpu.vector_store %arg6[%c0_10, %c0_11], %14 {strides = array<i32>} : memref<8x128xbf16, #tpu.memory_space<vmem>>, vector<8x128xbf16>,
    return
  }
  func.func @transform_0(%arg0: i32) -> (i32, i32) {
    %c0_i32 = arith.constant 0 : i32
    %c0_i32_0 = arith.constant 0 : i32
    return %arg0, %c0_i32 : i32, i32
  }
  func.func @transform_1(%arg0: i32) -> (i32, i32) {
    %c0_i32 = arith.constant 0 : i32
    %c0_i32_0 = arith.constant 0 : i32
    %c0_i32_1 = arith.constant 0 : i32
    return %c0_i32, %c0_i32_0 : i32, i32
  }
  func.func @transform_2(%arg0: i32) -> (i32, i32) {
    %c0_i32 = arith.constant 0 : i32
    %c0_i32_0 = arith.constant 0 : i32
    %c0_i32_1 = arith.constant 0 : i32
    return %c0_i32, %c0_i32_0 : i32, i32
  }
  func.func @transform_3(%arg0: i32) -> (i32, i32) {
    %c0_i32 = arith.constant 0 : i32
    %c0_i32_0 = arith.constant 0 : i32
    %c0_i32_1 = arith.constant 0 : i32
    return %c0_i32, %c0_i32_0 : i32, i32
  }
  func.func @transform_4(%arg0: i32) -> (i32, i32) {
    %c0_i32 = arith.constant 0 : i32
    %c0_i32_0 = arith.constant 0 : i32
    %c0_i32_1 = arith.constant 0 : i32
    return %c0_i32, %c0_i32_0 : i32, i32
  }
  func.func @transform_5(%arg0: i32) -> (i32, i32) {
    %c0_i32 = arith.constant 0 : i32
    %c0_i32_0 = arith.constant 0 : i32
    return %arg0, %c0_i32 : i32, i32
  }
}

</mosaic_0001>

<llo_original>
// kernel: option_critic_unshared_forward.1
$region0: #{option_critic_unshared_forward.1}
  #allocation0 [shape = 'u32[]', space=smem, size = 0x4, offset = 0x4, fixed_abs, tag = 'smem constant byte address 0x4 - core index']
  #allocation1 [shape = 'u32[72,128]{1,0:T(1,128)}', space=vmem, size = 0x9000, scoped, tag = 'internal scratch']
  %s0 = inlined_call_operand.hbm [shape: f32[8,64], index: 0, kind: input, shape index: {}]
  %s1 = inlined_call_operand.hbm [shape: bf16[64,256], index: 1, kind: input, shape index: {}]
  %s2 = inlined_call_operand.hbm [shape: f32[1,256], index: 2, kind: input, shape index: {}]
  %s3 = inlined_call_operand.hbm [shape: bf16[256,128], index: 3, kind: input, shape index: {}]
  %s4 = inlined_call_operand.hbm [shape: f32[1,128], index: 4, kind: input, shape index: {}]
  %s5 = inlined_call_operand.vmem [shape: bf16[8,128], index: 5, kind: output, shape index: {}]
  %s6 = sld [smem:[#allocation0]]
  $region50: #{option_critic_unshared_forward.1} parent=0
    _
  %s8 = ssub.s32 1, %s6
  %s9 = scalar_select 0, %s8, %s6
  $region1: #{option_critic_unshared_forward.1} parent=0
    #allocation2 [shape = 'u8[4096]{0}', space=vmem, size = 0x1000, scoped, tag = 'input window, operand 0, single buffered']
    #allocation3 [shape = 's32[1]{0}', space=sflag, size = 0x4, scoped, tag = 'scoped memory for option_critic_unshared_forward.1']
    #allocation4 [shape = 'u8[32768]{0}', space=vmem, size = 0x8000, scoped, tag = 'input window, operand 1, single buffered']
    #allocation5 [shape = 's32[1]{0}', space=sflag, size = 0x4, scoped, tag = 'scoped memory for option_critic_unshared_forward.1']
    #allocation6 [shape = 'u8[1024]{0}', space=vmem, size = 0x400, scoped, tag = 'input window, operand 2, single buffered']
    #allocation7 [shape = 'u8[65536]{0}', space=vmem, size = 0x10000, scoped, tag = 'input window, operand 3, single buffered']
    #allocation8 [shape = 's32[1]{0}', space=sflag, size = 0x4, scoped, tag = 'scoped memory for option_critic_unshared_forward.1']
    #allocation9 [shape = 'u8[512]{0}', space=vmem, size = 0x400, scoped, tag = 'input window, operand 4, single buffered']
    %10 = vsyncpa [#allocation3], 0
    %11 = vsyncpa [#allocation5], 0
    %12 = vsyncpa [#allocation8], 0
    // Predicated region
    $region2: #{option_critic_unshared_forward.1} parent=1 // pred_check
      _
    $region3: #{option_critic_unshared_forward.1} parent=1 // pred_check_branch
      %14 = sbr.rel (0) target = $region5
    $region4: #{option_critic_unshared_forward.1} parent=1 // pred_region
      %16 = vsyncadd [#allocation3], 0
      %s18 = sshll.u32 %s0, 4
      %s19 = int_to_ptr.hbm [resolvable:$true] %s18
      %s20 = sshll.u32 [#allocation2], 4
      %s21 = int_to_ptr.vmem [resolvable:$true] %s20
      %23 = dma.hbm_to_vmem [thread:$0]  %s19, 128, %s21, [#allocation3]
    $region5: #{option_critic_unshared_forward.1} parent=1 // pred_fallthru
      _
    // Predicated region
    $region6: #{option_critic_unshared_forward.1} parent=1 // pred_check
      _
    $region7: #{option_critic_unshared_forward.1} parent=1 // pred_check_branch
      %25 = sbr.rel (0) target = $region9
    $region8: #{option_critic_unshared_forward.1} parent=1 // pred_region
      %27 = vsyncadd [#allocation5], 0
      %s28 = sshll.u32 %s1, 4
      %s29 = int_to_ptr.hbm [resolvable:$true] %s28
      %s30 = sshll.u32 [#allocation4], 4
      %s31 = int_to_ptr.vmem [resolvable:$true] %s30
      %36 = dma.hbm_to_vmem [thread:$0]  %s29, 1024, %s31, [#allocation5], 128, 128, 8
    $region9: #{option_critic_unshared_forward.1} parent=1 // pred_fallthru
      _
    // Predicated region
    $region10: #{option_critic_unshared_forward.1} parent=1 // pred_check
      _
    $region11: #{option_critic_unshared_forward.1} parent=1 // pred_check_branch
      %38 = sbr.rel (0) target = $region13
    $region12: #{option_critic_unshared_forward.1} parent=1 // pred_region
      %40 = vsyncadd [#allocation5], 0
      %s42 = sshll.u32 %s2, 4
      %s43 = int_to_ptr.hbm [resolvable:$true] %s42
      %s44 = sshll.u32 [#allocation6], 4
      %s45 = int_to_ptr.vmem [resolvable:$true] %s44
      %47 = dma.hbm_to_vmem [thread:$0]  %s43, 32, %s45, [#allocation5]
    $region13: #{option_critic_unshared_forward.1} parent=1 // pred_fallthru
      _
    // Predicated region
    $region14: #{option_critic_unshared_forward.1} parent=1 // pred_check
      _
    $region15: #{option_critic_unshared_forward.1} parent=1 // pred_check_branch
      %49 = sbr.rel (0) target = $region17
    $region16: #{option_critic_unshared_forward.1} parent=1 // pred_region
      %51 = vsyncadd [#allocation8], 0
      %s52 = sshll.u32 %s3, 4
      %s53 = int_to_ptr.hbm [resolvable:$true] %s52
      %s54 = sshll.u32 [#allocation7], 4
      %s55 = int_to_ptr.vmem [resolvable:$true] %s54
      %60 = dma.hbm_to_vmem [thread:$0]  %s53, 2048, %s55, [#allocation8], 64, 64, 4
    $region17: #{option_critic_unshared_forward.1} parent=1 // pred_fallthru
      _
    // Predicated region
    $region18: #{option_critic_unshared_forward.1} parent=1 // pred_check
      _
    $region19: #{option_critic_unshared_forward.1} parent=1 // pred_check_branch
      %62 = sbr.rel (0) target = $region21
    $region20: #{option_critic_unshared_forward.1} parent=1 // pred_region
      %64 = vsyncadd [#allocation8], 0
      %s66 = sshll.u32 %s4, 4
      %s67 = int_to_ptr.hbm [resolvable:$true] %s66
      %s68 = sshll.u32 [#allocation9], 4
      %s69 = int_to_ptr.vmem [resolvable:$true] %s68
      %71 = dma.hbm_to_vmem [thread:$0]  %s67, 16, %s69, [#allocation8]
    $region21: #{option_critic_unshared_forward.1} parent=1 // pred_fallthru
      _
    // Predicated region
    $region22: #{option_critic_unshared_forward.1} parent=1 // pred_check
      _
    $region23: #{option_critic_unshared_forward.1} parent=1 // pred_check_branch
      %73 = sbr.rel (0) target = $region25
    $region24: #{option_critic_unshared_forward.1} parent=1 // pred_region
      %75 = dma.done [#allocation3], 128
    $region25: #{option_critic_unshared_forward.1} parent=1 // pred_fallthru
      _
    // Predicated region
    $region26: #{option_critic_unshared_forward.1} parent=1 // pred_check
      _
    $region27: #{option_critic_unshared_forward.1} parent=1 // pred_check_branch
      %77 = sbr.rel (0) target = $region29
    $region28: #{option_critic_unshared_forward.1} parent=1 // pred_region
      %79 = dma.done [#allocation5], 1024
    $region29: #{option_critic_unshared_forward.1} parent=1 // pred_fallthru
      _
    // Predicated region
    $region30: #{option_critic_unshared_forward.1} parent=1 // pred_check
      _
    $region31: #{option_critic_unshared_forward.1} parent=1 // pred_check_branch
      %81 = sbr.rel (0) target = $region33
    $region32: #{option_critic_unshared_forward.1} parent=1 // pred_region
      %83 = dma.done [#allocation5], 32
    $region33: #{option_critic_unshared_forward.1} parent=1 // pred_fallthru
      _
    // Predicated region
    $region34: #{option_critic_unshared_forward.1} parent=1 // pred_check
      _
    $region35: #{option_critic_unshared_forward.1} parent=1 // pred_check_branch
      %85 = sbr.rel (0) target = $region37
    $region36: #{option_critic_unshared_forward.1} parent=1 // pred_region
      %87 = dma.done [#allocation8], 2048
    $region37: #{option_critic_unshared_forward.1} parent=1 // pred_fallthru
      _
    // Predicated region
    $region38: #{option_critic_unshared_forward.1} parent=1 // pred_check
      _
    $region39: #{option_critic_unshared_forward.1} parent=1 // pred_check_branch
      %89 = sbr.rel (0) target = $region41
    $region40: #{option_critic_unshared_forward.1} parent=1 // pred_region
      %91 = dma.done [#allocation8], 16
    $region41: #{option_critic_unshared_forward.1} parent=1 // pred_fallthru
      _
    %v93 = vld [vmem:[#allocation2] sm:$0xff]
    %v94 = vpack.c.bf16 %v93, %v93
    %v95 = vld [vmem:[#allocation4] sm:$0xff]
    %v96 = vld [vmem:[#allocation4 + $0x8] sm:$0xff]
    %v97 = vld [vmem:[#allocation4 + $0x10] sm:$0xff]
    %v98 = vld [vmem:[#allocation4 + $0x18] sm:$0xff]
    %v99 = vld [vmem:[#allocation4 + $0x20] sm:$0xff]
    %v100 = vld [vmem:[#allocation4 + $0x28] sm:$0xff]
    %v101 = vld [vmem:[#allocation4 + $0x30] sm:$0xff]
    %v102 = vld [vmem:[#allocation4 + $0x38] sm:$0xff]
    %v103 = vld [vmem:[#allocation6] sm:$0x3]
    %v105 = vperm.slane %v103, 0
    %v106 = vperm.slane %v103, 1
    %v117 = vunpack.c.l.b16 %v95
    %v118 = vunpack.c.h.b16 %v95
    %v119 = vunpack.c.l.b16 %v96
    %v120 = vunpack.c.h.b16 %v96
    %v121 = vunpack.c.l.b16 %v97
    %v122 = vunpack.c.h.b16 %v97
    %v123 = vunpack.c.l.b16 %v98
    %v124 = vunpack.c.h.b16 %v98
    %v125 = vunpack.c.l.b16 %v99
    %v126 = vunpack.c.h.b16 %v99
    %v127 = vunpack.c.l.b16 %v100
    %v128 = vunpack.c.h.b16 %v100
    %v129 = vunpack.c.l.b16 %v101
    %v130 = vunpack.c.h.b16 %v101
    %v131 = vunpack.c.l.b16 %v102
    %v132 = vunpack.c.h.b16 %v102
    %v133 = vpack.c.b16 %v119, %v117
    %v134 = vpack.c.b16 %v120, %v118
    %v135 = vpack.c.b16 %v123, %v121
    %v136 = vpack.c.b16 %v124, %v122
    %v137 = vpack.c.b16 %v127, %v125
    %v138 = vpack.c.b16 %v128, %v126
    %v139 = vpack.c.b16 %v131, %v129
    %v140 = vpack.c.b16 %v132, %v130
    %vm149 = vcmask 523264
    %v151 = vsel %vm149, %v94, 0
    %153 = vmatpush.bf16.msra.mxu0 0
    %154 = vmatpush.bf16.msra.mxu0 0
    %155 = vmatpush.bf16.msra.mxu0 0
    %156 = vmatpush.bf16.msra.mxu0 0
    %157 = vmatpush.bf16.msra.mxu0 %v139
    %158 = vmatpush.bf16.msra.mxu0 %v137
    %159 = vmatpush.bf16.msra.mxu0 %v135
    %160 = vmatpush.bf16.msra.mxu0 %v133
    %161 = vmatmul.bf16.gmra.mxu0 %v151
    %v162 = vpop.f32.mrf.mxu0
    %v163 = vadd.f32 %v105, %v162
    %v164 = vpop.f32.mrf.mxu0
    %165 = vdwg.mxu0
    %166 = vmatpush.bf16.msra.mxu0 0
    %167 = vmatpush.bf16.msra.mxu0 0
    %168 = vmatpush.bf16.msra.mxu0 0
    %169 = vmatpush.bf16.msra.mxu0 0
    %170 = vmatpush.bf16.msra.mxu0 %v140
    %171 = vmatpush.bf16.msra.mxu0 %v138
    %172 = vmatpush.bf16.msra.mxu0 %v136
    %173 = vmatpush.bf16.msra.mxu0 %v134
    %174 = vmatmul.bf16.gmra.mxu0 %v151
    %v175 = vpop.f32.mrf.mxu0
    %v176 = vadd.f32 %v106, %v175
    %v177 = vpop.f32.mrf.mxu0
    %178 = vdwg.mxu0
    %v179 = vtanh.pop %v163
    %v180 = vtanh.pop %v176
    %v181 = vpack.c.bf16 %v179, %v179
    %v182 = vpack.c.bf16 %v180, %v180
    %v183 = vld [vmem:[#allocation7] sm:$0xf]
    %v184 = vld [vmem:[#allocation7 + $0x4] sm:$0xf]
    %v185 = vld [vmem:[#allocation7 + $0x8] sm:$0xf]
    %v186 = vld [vmem:[#allocation7 + $0xc] sm:$0xf]
    %v187 = vld [vmem:[#allocation7 + $0x10] sm:$0xf]
    %v188 = vld [vmem:[#allocation7 + $0x14] sm:$0xf]
    %v189 = vld [vmem:[#allocation7 + $0x18] sm:$0xf]
    %v190 = vld [vmem:[#allocation7 + $0x1c] sm:$0xf]
    %v191 = vld [vmem:[#allocation7 + $0x20] sm:$0xf]
    %v192 = vld [vmem:[#allocation7 + $0x24] sm:$0xf]
    %v193 = vld [vmem:[#allocation7 + $0x28] sm:$0xf]
    %v194 = vld [vmem:[#allocation7 + $0x2c] sm:$0xf]
    %v195 = vld [vmem:[#allocation7 + $0x30] sm:$0xf]
    %v196 = vld [vmem:[#allocation7 + $0x34] sm:$0xf]
    %v197 = vld [vmem:[#allocation7 + $0x38] sm:$0xf]
    %v198 = vld [vmem:[#allocation7 + $0x3c] sm:$0xf]
    %v199 = vld [vmem:[#allocation7 + $0x40] sm:$0xf]
    %v200 = vld [vmem:[#allocation7 + $0x44] sm:$0xf]
    %v201 = vld [vmem:[#allocation7 + $0x48] sm:$0xf]
    %v202 = vld [vmem:[#allocation7 + $0x4c] sm:$0xf]
    %v203 = vld [vmem:[#allocation7 + $0x50] sm:$0xf]
    %v204 = vld [vmem:[#allocation7 + $0x54] sm:$0xf]
    %v205 = vld [vmem:[#allocation7 + $0x58] sm:$0xf]
    %v206 = vld [vmem:[#allocation7 + $0x5c] sm:$0xf]
    %v207 = vld [vmem:[#allocation7 + $0x60] sm:$0xf]
    %v208 = vld [vmem:[#allocation7 + $0x64] sm:$0xf]
    %v209 = vld [vmem:[#allocation7 + $0x68] sm:$0xf]
    %v210 = vld [vmem:[#allocation7 + $0x6c] sm:$0xf]
    %v211 = vld [vmem:[#allocation7 + $0x70] sm:$0xf]
    %v212 = vld [vmem:[#allocation7 + $0x74] sm:$0xf]
    %v213 = vld [vmem:[#allocation7 + $0x78] sm:$0xf]
    %v214 = vld [vmem:[#allocation7 + $0x7c] sm:$0xf]
    %v215 = vld [vmem:[#allocation9] sm:$0x1]
    %v217 = vperm.slane %v215, 0
    %v251 = vunpack.c.l.b16 %v183
    %v252 = vunpack.c.l.b16 %v184
    %v253 = vunpack.c.l.b16 %v185
    %v254 = vunpack.c.l.b16 %v186
    %v255 = vunpack.c.l.b16 %v187
    %v256 = vunpack.c.l.b16 %v188
    %v257 = vunpack.c.l.b16 %v189
    %v258 = vunpack.c.l.b16 %v190
    %v259 = vunpack.c.l.b16 %v191
    %v260 = vunpack.c.l.b16 %v192
    %v261 = vunpack.c.l.b16 %v193
    %v262 = vunpack.c.l.b16 %v194
    %v263 = vunpack.c.l.b16 %v195
    %v264 = vunpack.c.l.b16 %v196
    %v265 = vunpack.c.l.b16 %v197
    %v266 = vunpack.c.l.b16 %v198
    %v267 = vunpack.c.l.b16 %v199
    %v268 = vunpack.c.l.b16 %v200
    %v269 = vunpack.c.l.b16 %v201
    %v270 = vunpack.c.l.b16 %v202
    %v271 = vunpack.c.l.b16 %v203
    %v272 = vunpack.c.l.b16 %v204
    %v273 = vunpack.c.l.b16 %v205
    %v274 = vunpack.c.l.b16 %v206
    %v275 = vunpack.c.l.b16 %v207
    %v276 = vunpack.c.l.b16 %v208
    %v277 = vunpack.c.l.b16 %v209
    %v278 = vunpack.c.l.b16 %v210
    %v279 = vunpack.c.l.b16 %v211
    %v280 = vunpack.c.l.b16 %v212
    %v281 = vunpack.c.l.b16 %v213
    %v282 = vunpack.c.l.b16 %v214
    %v283 = vpack.c.b16 %v252, %v251
    %v284 = vpack.c.b16 %v254, %v253
    %v285 = vpack.c.b16 %v256, %v255
    %v286 = vpack.c.b16 %v258, %v257
    %v287 = vpack.c.b16 %v260, %v259
    %v288 = vpack.c.b16 %v262, %v261
    %v289 = vpack.c.b16 %v264, %v263
    %v290 = vpack.c.b16 %v266, %v265
    %v291 = vpack.c.b16 %v268, %v267
    %v292 = vpack.c.b16 %v270, %v269
    %v293 = vpack.c.b16 %v272, %v271
    %v294 = vpack.c.b16 %v274, %v273
    %v295 = vpack.c.b16 %v276, %v275
    %v296 = vpack.c.b16 %v278, %v277
    %v297 = vpack.c.b16 %v280, %v279
    %v298 = vpack.c.b16 %v282, %v281
    %315 = vmatpush.bf16.msra.mxu0 %v290
    %316 = vmatpush.bf16.msra.mxu0 %v289
    %317 = vmatpush.bf16.msra.mxu0 %v288
    %318 = vmatpush.bf16.msra.mxu0 %v287
    %319 = vmatpush.bf16.msra.mxu0 %v286
    %320 = vmatpush.bf16.msra.mxu0 %v285
    %321 = vmatpush.bf16.msra.mxu0 %v284
    %322 = vmatpush.bf16.msra.mxu0 %v283
    %323 = vmatmul.bf16.gmra.mxu0 %v181
    %v324 = vpop.f32.mrf.mxu0
    %v325 = vadd.f32 %v217, %v324
    %v326 = vpop.f32.mrf.mxu0
    %327 = vdwg.mxu0
    %328 = vmatpush.bf16.msra.mxu0 %v298
    %329 = vmatpush.bf16.msra.mxu0 %v297
    %330 = vmatpush.bf16.msra.mxu0 %v296
    %331 = vmatpush.bf16.msra.mxu0 %v295
    %332 = vmatpush.bf16.msra.mxu0 %v294
    %333 = vmatpush.bf16.msra.mxu0 %v293
    %334 = vmatpush.bf16.msra.mxu0 %v292
    %335 = vmatpush.bf16.msra.mxu0 %v291
    %336 = vmatmul.bf16.gmra.mxu0 %v182
    %v337 = vpop.f32.mrf.mxu0
    %v338 = vadd.f32 %v325, %v337
    %v339 = vpop.f32.mrf.mxu0
    %340 = vdwg.mxu0
    %v341 = vpack.c.bf16 %v338, %v338
    %342 = vst [vmem:[%s5] sm:$0xf] %v341
    // Predicated region
    $region42: #{option_critic_unshared_forward.1} parent=1 // pred_check
      _
    $region43: #{option_critic_unshared_forward.1} parent=1 // pred_check_branch
      %344 = sbr.rel (0) target = $region45
    $region44: #{option_critic_unshared_forward.1} parent=1 // pred_region
      _
    $region45: #{option_critic_unshared_forward.1} parent=1 // pred_fallthru
      _
    // Predicated region
    $region46: #{option_critic_unshared_forward.1} parent=1 // pred_check
      _
    $region47: #{option_critic_unshared_forward.1} parent=1 // pred_check_branch
      %346 = sbr.rel (0) target = $region49
    $region48: #{option_critic_unshared_forward.1} parent=1 // pred_region
      _
    $region49: #{option_critic_unshared_forward.1} parent=1 // pred_fallthru
      _
    %347 = vsyncpa [#allocation3], 1
    %348 = vsyncpa [#allocation5], 1
    %349 = vsyncpa [#allocation8], 1

</llo_original>
